<compile_context>
chip_gen: v5e
topology: v5e:2x2
jax: 0.10.0
libtpu: 0.0.40
codegen_flags: <defaults>
</compile_context>

<pallas_src>
import functools

import jax
import jax.numpy as jnp
from jax.experimental import pallas as pl
from jax.experimental.pallas import tpu as pltpu

NEG_SLOPE = 0.2   # LeakyReLU slope used throughout the module
BN_EPS = 1e-5     # PyTorch BatchNorm default eps
LANE = 128


def _leaky_relu(v):
    return jnp.where(v >= 0, v, NEG_SLOPE * v)


def _lgfa_kernel(xm_ref, x_ref, wn_ref, ws_ref, wfc_ref, wout_ref, sh_ref, out_ref):
    """One (batch, N-tile) block per grid step; everything stays in VMEM."""
    C = wn_ref.shape[0]
    d = wfc_ref.shape[0]
    k_hat = xm_ref.shape[1]

    wn = wn_ref[...]                     # (C, 3) bf16, BN1 scale pre-folded
    bn1_b = sh_ref[0:C, 0:1]             # per-channel shifts (BN folded, biases folded)
    bn2_b = sh_ref[0:C, 1:2]
    fo_b = sh_ref[0:C, 2:3]
    fc_b = sh_ref[0:d, 3:4]

    # --- neighbor branch: per-neighbor 1x1 conv, running max over k_hat ---
    # bias + LeakyReLU are applied once after the max (exact: LeakyReLU is monotone
    # increasing and bn1_b does not depend on the neighbor index).
    a1 = jnp.dot(wn, xm_ref[0, 0], preferred_element_type=jnp.float32)
    for j in range(1, k_hat):            # static unroll, k_hat is small
        a1 = jnp.maximum(
            a1, jnp.dot(wn, xm_ref[0, j], preferred_element_type=jnp.float32))
    a1 = _leaky_relu(a1 + bn1_b)

    # --- self branch: 1x1 conv + BN + LeakyReLU ---
    a2 = jnp.dot(ws_ref[...], x_ref[0], preferred_element_type=jnp.float32)
    a2 = _leaky_relu(a2 + bn2_b)

    # --- DFA fusion: fc -> fc_out -> sigmoid gate -> blend (bf16 MXU, f32 accum) ---
    u = (a1 + a2).astype(jnp.bfloat16)
    z = jnp.dot(wfc_ref[...], u, preferred_element_type=jnp.float32) + fc_b
    cat = jnp.dot(wout_ref[...], z.astype(jnp.bfloat16),
                  preferred_element_type=jnp.float32) + fo_b
    attn = jax.nn.sigmoid(cat)
    out_ref[0] = (a2 + attn * (a1 - a2)).astype(out_ref.dtype)   # attn*a1 + (1-attn)*a2


def _bn_fold(bn):
    scale = bn["gamma"] / jnp.sqrt(bn["var"] + BN_EPS)
    shift = bn["beta"] - bn["mean"] * scale
    return scale, shift


@functools.partial(jax.jit, static_argnames=("tile_n",))
def lgfa_forward_pallas(x, idx, params, *, tile_n=2048):
    """x: (B, 3, N) float32, idx: (B, N, k_hat) int32 -> (B, C, N) bfloat16."""
    B, c_in, N = x.shape
    k_hat = idx.shape[-1]
    C = params["Wn"].shape[0]
    d = params["Wfc"].shape[0]

    # --- pick a lane-dense N tile (multiple of 128) and pad N up to a tile multiple ---
    tile_n = max(LANE, min(tile_n, pl.cdiv(N, LANE) * LANE))
    if B == 1 and pl.cdiv(N, LANE) >= 2:
        # keep the grid at >= 2 steps so both v7x TensorCores get work
        tile_n = min(tile_n, pl.cdiv(pl.cdiv(N, 2), LANE) * LANE)
    n_pad = pl.cdiv(N, tile_n) * tile_n
    if n_pad != N:
        x_p = jnp.pad(x, ((0, 0), (0, 0), (0, n_pad - N)))
        idx_p = jnp.pad(idx, ((0, 0), (0, n_pad - N), (0, 0)))   # garbage cols sliced off
    else:
        x_p, idx_p = x, idx

    # --- glue: get_graph_feature (gather + center subtraction), packed (B, k, 3, Npad) ---
    # TODO(synk): the kNN gather is still done in XLA; fusing it into the kernel (idx in
    # SMEM/VMEM + in-kernel gather or per-point DMA) would remove the k_hat x HBM round
    # trip of x_minus entirely, but a general data-dependent gather has no robust
    # Pallas-TPU lowering today.
    xt = jnp.transpose(x_p, (0, 2, 1))                       # (B, Npad, 3)
    gathered = jax.vmap(lambda xb, ib: xb[ib])(xt, idx_p)    # (B, Npad, k, 3)
    x_minus = gathered - xt[:, :, None, :]                   # (B, Npad, k, 3)
    x_minus = jnp.transpose(x_minus, (0, 2, 3, 1))           # (B, k, 3, Npad)
    x_minus = x_minus.astype(jnp.bfloat16)
    x_bf16 = x_p.astype(jnp.bfloat16)

    # --- glue: fold eval-mode BN (+ DFA conv biases) into weights / per-channel shifts ---
    bn1_s, bn1_b = _bn_fold(params["bn"])
    bn2_s, bn2_b = _bn_fold(params["bn2"])
    fc_s, fc_b = _bn_fold(params["bn_fc"])
    fc_b = fc_s * params["b_fc"] + fc_b
    fo_s, fo_b = _bn_fold(params["bn_fo"])
    fo_b = fo_s * params["b_out"] + fo_b

    wn = (bn1_s[:, None] * params["Wn"]).astype(jnp.bfloat16)     # (C, 3)
    ws = (bn2_s[:, None] * params["Ws"]).astype(jnp.bfloat16)     # (C, 3)
    wfc = (fc_s[:, None] * params["Wfc"]).astype(jnp.bfloat16)    # (d, C)
    wout = (fo_s[:, None] * params["Wout"]).astype(jnp.bfloat16)  # (C, d)

    # single packed shift table: columns = [bn1_b, bn2_b, fc_out_b, fc_b]
    P = max(C, d)
    shifts = jnp.zeros((P, 4), jnp.float32)
    shifts = shifts.at[:C, 0].set(bn1_b).at[:C, 1].set(bn2_b)
    shifts = shifts.at[:C, 2].set(fo_b).at[:d, 3].set(fc_b)

    const = lambda shape: pl.BlockSpec(shape, lambda b, t: (0,) * len(shape))

    # VMEM footprint per step (double-buffered) stays < a few MiB for C <= 256 and
    # tile_n <= 4096; re-derive against v7x's 64 MiB physical VMEM if scaling further.
    out = pl.pallas_call(
        _lgfa_kernel,
        out_shape=jax.ShapeDtypeStruct((B, C, n_pad), jnp.bfloat16),
        grid=(B, n_pad // tile_n),
        in_specs=[
            pl.BlockSpec((1, k_hat, c_in, tile_n), lambda b, t: (b, 0, 0, t)),  # x_minus
            pl.BlockSpec((1, c_in, tile_n), lambda b, t: (b, 0, t)),            # x (bf16)
            const((C, c_in)),     # Wn   (BN1 scale folded)
            const((C, c_in)),     # Ws   (BN2 scale folded)
            const((d, C)),        # Wfc  (fc BN scale folded)
            const((C, d)),        # Wout (fc_out BN scale folded)
            const((P, 4)),        # packed shifts
        ],
        out_specs=pl.BlockSpec((1, C, tile_n), lambda b, t: (b, 0, t)),
        compiler_params=pltpu.CompilerParams(
            dimension_semantics=("parallel", "parallel"),
            vmem_limit_bytes=32 * 1024 * 1024),
    )(x_minus, x_bf16, wn, ws, wfc, wout, shifts)

    # TODO(synk): `last_layers` is an empty nn.Sequential when len(out_channel_list)==1
    # (the case modeled here); for longer lists the PyTorch module would apply Conv2d to
    # a 3-D tensor, which is ill-defined, so it is not implemented.
    return out[:, :, :N]


def lgfa_forward_ref(x, idx, params):
    """Pure-JAX f32 reference reproducing the PyTorch forward (eval-mode BN)."""
    hp = jax.lax.Precision.HIGHEST
    xt = jnp.transpose(x, (0, 2, 1))
    gathered = jax.vmap(lambda xb, ib: xb[ib])(xt, idx)
    xm = gathered - xt[:, :, None, :]                      # (B, N, k, 3)

    def bn_apply(v, bn, bias=None):
        s, b = _bn_fold(bn)
        if bias is not None:
            b = s * bias + b
        bc = (1, -1) + (1,) * (v.ndim - 2)
        return v * s.reshape(bc) + b.reshape(bc)

    a1 = jnp.einsum("oc,bnkc->bonk", params["Wn"], xm, precision=hp)   # (B,C,N,k)
    a1 = _leaky_relu(bn_apply(a1, params["bn"]))
    a1 = a1.max(axis=-1)                                               # (B,C,N)
    a2 = jnp.einsum("oc,bcn->bon", params["Ws"], x, precision=hp)
    a2 = _leaky_relu(bn_apply(a2, params["bn2"]))
    u = a1 + a2
    z = bn_apply(jnp.einsum("dc,bcn->bdn", params["Wfc"], u, precision=hp),
                 params["bn_fc"], params["b_fc"])
    cat = bn_apply(jnp.einsum("cd,bdn->bcn", params["Wout"], z, precision=hp),
                   params["bn_fo"], params["b_out"])
    attn = jax.nn.sigmoid(cat)
    return attn * a1 + (1.0 - attn) * a2


def init_params(key, in_channel, out_channel, L=32):
    """Deterministic synthetic parameters matching the module's __init__ shapes."""
    d = max(out_channel, L)   # DFA: d = max(features / r, L), r = 1

    def bn_params(k, c):
        k1, k2, k3, k4 = jax.random.split(k, 4)
        return dict(
            gamma=1.0 + 0.1 * jax.random.normal(k1, (c,), jnp.float32),
            beta=0.1 * jax.random.normal(k2, (c,), jnp.float32),
            mean=0.05 * jax.random.normal(k3, (c,), jnp.float32),
            var=jax.random.uniform(k4, (c,), jnp.float32, 0.5, 1.5),
        )

    ks = jax.random.split(key, 10)
    return dict(
        Wn=0.5 * jax.random.normal(ks[0], (out_channel, in_channel), jnp.float32),
        Ws=0.5 * jax.random.normal(ks[1], (out_channel, in_channel), jnp.float32),
        Wfc=jax.random.normal(ks[2], (d, out_channel), jnp.float32) / jnp.sqrt(out_channel),
        b_fc=0.1 * jax.random.normal(ks[3], (d,), jnp.float32),
        Wout=jax.random.normal(ks[4], (out_channel, d), jnp.float32) / jnp.sqrt(d),
        b_out=0.1 * jax.random.normal(ks[5], (out_channel,), jnp.float32),
        bn=bn_params(ks[6], out_channel),      # LGFA self.bn   (BatchNorm2d)
        bn2=bn_params(ks[7], out_channel),     # LGFA self.bn2  (BatchNorm1d)
        bn_fc=bn_params(ks[8], d),             # DFA fc BN
        bn_fo=bn_params(ks[9], out_channel),   # DFA fc_out BN
    )


if __name__ == "__main__":
    B, C_IN, N, K_HAT, C_OUT = 2, 3, 16, 8, 32   # out_channel_list = [32]
    key = jax.random.PRNGKey(0)
    kx, kidx, kp = jax.random.split(key, 3)
    x = jax.random.normal(kx, (B, C_IN, N), jnp.float32)            # (B, 3, N)
    idx = jax.random.randint(kidx, (B, N, K_HAT), 0, N, jnp.int32)  # (B, N, k_hat)
    params = init_params(kp, C_IN, C_OUT)

    out = jax.block_until_ready(lgfa_forward_pallas(x, idx, params))
    ref = jax.block_until_ready(lgfa_forward_ref(x, idx, params))

    assert out.shape == (B, C_OUT, N), out.shape
    assert out.dtype == jnp.bfloat16, out.dtype
    out_f32 = out.astype(jnp.float32)
    max_err = float(jnp.max(jnp.abs(out_f32 - ref)))
    rel_l2 = float(jnp.linalg.norm(out_f32 - ref) / jnp.linalg.norm(ref))
    # Kernel uses bf16 inputs/weights/output + single-pass MXU matmuls; ref is f32 HIGHEST.
    assert rel_l2 < 5e-2, f"relative L2 error = {rel_l2} (max abs err = {max_err})"
    assert jnp.allclose(out_f32, ref, rtol=1e-1, atol=1e-1), f"max abs err = {max_err}"
    print("KERNEL_OK")
</pallas_src>

<mosaic_0001>
module attributes {stable_mosaic.version = 11 : i64} {
  func.func @_lgfa_kernel(%arg0: i32, %arg1: i32, %arg2: memref<1x8x3x128xbf16, #tpu.memory_space<vmem>>, %arg3: memref<1x3x128xbf16, #tpu.memory_space<vmem>>, %arg4: memref<32x3xbf16, #tpu.memory_space<vmem>>, %arg5: memref<32x3xbf16, #tpu.memory_space<vmem>>, %arg6: memref<32x32xbf16, #tpu.memory_space<vmem>>, %arg7: memref<32x32xbf16, #tpu.memory_space<vmem>>, %arg8: memref<32x4xf32, #tpu.memory_space<vmem>>, %arg9: memref<1x32x128xbf16, #tpu.memory_space<vmem>>) attributes {dimension_semantics = [#tpu.dimension_semantics<parallel>, #tpu.dimension_semantics<parallel>], iteration_bounds = array<i64: 2, 1>, scalar_prefetch = 0 : i64, scratch_operands = 0 : i64, tpu.core_type = #tpu.core_type<tc>, window_params = [{transform_indices = @transform_0, window_bounds = array<i64: 1, 8, 3, 128>}, {transform_indices = @transform_1, window_bounds = array<i64: 1, 3, 128>}, {pipeline_mode = #tpu.pipeline_mode<synchronous>, transform_indices = @transform_2, window_bounds = array<i64: 32, 3>}, {pipeline_mode = #tpu.pipeline_mode<synchronous>, transform_indices = @transform_3, window_bounds = array<i64: 32, 3>}, {pipeline_mode = #tpu.pipeline_mode<synchronous>, transform_indices = @transform_4, window_bounds = array<i64: 32, 32>}, {pipeline_mode = #tpu.pipeline_mode<synchronous>, transform_indices = @transform_5, window_bounds = array<i64: 32, 32>}, {pipeline_mode = #tpu.pipeline_mode<synchronous>, transform_indices = @transform_6, window_bounds = array<i64: 32, 4>}, {transform_indices = @transform_7, window_bounds = array<i64: 1, 32, 128>}]} {
    %c0 = arith.constant 0 : index
    %c0_0 = arith.constant 0 : index
    %0 = vector.load %arg4[%c0, %c0_0] : memref<32x3xbf16, #tpu.memory_space<vmem>>, vector<32x3xbf16>
    %c0_1 = arith.constant 0 : index
    %c0_2 = arith.constant 0 : index
    %1 = vector.load %arg8[%c0_1, %c0_2] : memref<32x4xf32, #tpu.memory_space<vmem>>, vector<32x1xf32>
    %c0_3 = arith.constant 0 : index
    %c1 = arith.constant 1 : index
    %2 = vector.load %arg8[%c0_3, %c1] : memref<32x4xf32, #tpu.memory_space<vmem>>, vector<32x1xf32>
    %c0_4 = arith.constant 0 : index
    %c2 = arith.constant 2 : index
    %3 = vector.load %arg8[%c0_4, %c2] : memref<32x4xf32, #tpu.memory_space<vmem>>, vector<32x1xf32>
    %c0_5 = arith.constant 0 : index
    %c3 = arith.constant 3 : index
    %4 = vector.load %arg8[%c0_5, %c3] : memref<32x4xf32, #tpu.memory_space<vmem>>, vector<32x1xf32>
    %c0_6 = arith.constant 0 : index
    %c0_7 = arith.constant 0 : index
    %c0_8 = arith.constant 0 : index
    %c0_9 = arith.constant 0 : index
    %5 = vector.load %arg2[%c0_6, %c0_7, %c0_8, %c0_9] : memref<1x8x3x128xbf16, #tpu.memory_space<vmem>>, vector<1x1x3x128xbf16>
    %6 = vector.shape_cast %5 : vector<1x1x3x128xbf16> to vector<3x128xbf16>
    %cst = arith.constant dense<0.000000e+00> : vector<32x128xf32>
    %7 = tpu.matmul %0, %6, %cst {dimension_numbers = #tpu.dot_dimension_numbers<[1], [0], [0], [1], [0, 0, 1, 1], [], []>} : vector<32x3xbf16>, vector<3x128xbf16>, vector<32x128xf32> -> vector<32x128xf32>
    %c0_10 = arith.constant 0 : index
    %c1_11 = arith.constant 1 : index
    %c0_12 = arith.constant 0 : index
    %c0_13 = arith.constant 0 : index
    %8 = vector.load %arg2[%c0_10, %c1_11, %c0_12, %c0_13] : memref<1x8x3x128xbf16, #tpu.memory_space<vmem>>, vector<1x1x3x128xbf16>
    %9 = vector.shape_cast %8 : vector<1x1x3x128xbf16> to vector<3x128xbf16>
    %cst_14 = arith.constant dense<0.000000e+00> : vector<32x128xf32>
    %10 = tpu.matmul %0, %9, %cst_14 {dimension_numbers = #tpu.dot_dimension_numbers<[1], [0], [0], [1], [0, 0, 1, 1], [], []>} : vector<32x3xbf16>, vector<3x128xbf16>, vector<32x128xf32> -> vector<32x128xf32>
    %11 = arith.maximumf %7, %10 : vector<32x128xf32>
    %c0_15 = arith.constant 0 : index
    %c2_16 = arith.constant 2 : index
    %c0_17 = arith.constant 0 : index
    %c0_18 = arith.constant 0 : index
    %12 = vector.load %arg2[%c0_15, %c2_16, %c0_17, %c0_18] : memref<1x8x3x128xbf16, #tpu.memory_space<vmem>>, vector<1x1x3x128xbf16>
    %13 = vector.shape_cast %12 : vector<1x1x3x128xbf16> to vector<3x128xbf16>
    %cst_19 = arith.constant dense<0.000000e+00> : vector<32x128xf32>
    %14 = tpu.matmul %0, %13, %cst_19 {dimension_numbers = #tpu.dot_dimension_numbers<[1], [0], [0], [1], [0, 0, 1, 1], [], []>} : vector<32x3xbf16>, vector<3x128xbf16>, vector<32x128xf32> -> vector<32x128xf32>
    %15 = arith.maximumf %11, %14 : vector<32x128xf32>
    %c0_20 = arith.constant 0 : index
    %c3_21 = arith.constant 3 : index
    %c0_22 = arith.constant 0 : index
    %c0_23 = arith.constant 0 : index
    %16 = vector.load %arg2[%c0_20, %c3_21, %c0_22, %c0_23] : memref<1x8x3x128xbf16, #tpu.memory_space<vmem>>, vector<1x1x3x128xbf16>
    %17 = vector.shape_cast %16 : vector<1x1x3x128xbf16> to vector<3x128xbf16>
    %cst_24 = arith.constant dense<0.000000e+00> : vector<32x128xf32>
    %18 = tpu.matmul %0, %17, %cst_24 {dimension_numbers = #tpu.dot_dimension_numbers<[1], [0], [0], [1], [0, 0, 1, 1], [], []>} : vector<32x3xbf16>, vector<3x128xbf16>, vector<32x128xf32> -> vector<32x128xf32>
    %19 = arith.maximumf %15, %18 : vector<32x128xf32>
    %c0_25 = arith.constant 0 : index
    %c4 = arith.constant 4 : index
    %c0_26 = arith.constant 0 : index
    %c0_27 = arith.constant 0 : index
    %20 = vector.load %arg2[%c0_25, %c4, %c0_26, %c0_27] : memref<1x8x3x128xbf16, #tpu.memory_space<vmem>>, vector<1x1x3x128xbf16>
    %21 = vector.shape_cast %20 : vector<1x1x3x128xbf16> to vector<3x128xbf16>
    %cst_28 = arith.constant dense<0.000000e+00> : vector<32x128xf32>
    %22 = tpu.matmul %0, %21, %cst_28 {dimension_numbers = #tpu.dot_dimension_numbers<[1], [0], [0], [1], [0, 0, 1, 1], [], []>} : vector<32x3xbf16>, vector<3x128xbf16>, vector<32x128xf32> -> vector<32x128xf32>
    %23 = arith.maximumf %19, %22 : vector<32x128xf32>
    %c0_29 = arith.constant 0 : index
    %c5 = arith.constant 5 : index
    %c0_30 = arith.constant 0 : index
    %c0_31 = arith.constant 0 : index
    %24 = vector.load %arg2[%c0_29, %c5, %c0_30, %c0_31] : memref<1x8x3x128xbf16, #tpu.memory_space<vmem>>, vector<1x1x3x128xbf16>
    %25 = vector.shape_cast %24 : vector<1x1x3x128xbf16> to vector<3x128xbf16>
    %cst_32 = arith.constant dense<0.000000e+00> : vector<32x128xf32>
    %26 = tpu.matmul %0, %25, %cst_32 {dimension_numbers = #tpu.dot_dimension_numbers<[1], [0], [0], [1], [0, 0, 1, 1], [], []>} : vector<32x3xbf16>, vector<3x128xbf16>, vector<32x128xf32> -> vector<32x128xf32>
    %27 = arith.maximumf %23, %26 : vector<32x128xf32>
    %c0_33 = arith.constant 0 : index
    %c6 = arith.constant 6 : index
    %c0_34 = arith.constant 0 : index
    %c0_35 = arith.constant 0 : index
    %28 = vector.load %arg2[%c0_33, %c6, %c0_34, %c0_35] : memref<1x8x3x128xbf16, #tpu.memory_space<vmem>>, vector<1x1x3x128xbf16>
    %29 = vector.shape_cast %28 : vector<1x1x3x128xbf16> to vector<3x128xbf16>
    %cst_36 = arith.constant dense<0.000000e+00> : vector<32x128xf32>
    %30 = tpu.matmul %0, %29, %cst_36 {dimension_numbers = #tpu.dot_dimension_numbers<[1], [0], [0], [1], [0, 0, 1, 1], [], []>} : vector<32x3xbf16>, vector<3x128xbf16>, vector<32x128xf32> -> vector<32x128xf32>
    %31 = arith.maximumf %27, %30 : vector<32x128xf32>
    %c0_37 = arith.constant 0 : index
    %c7 = arith.constant 7 : index
    %c0_38 = arith.constant 0 : index
    %c0_39 = arith.constant 0 : index
    %32 = vector.load %arg2[%c0_37, %c7, %c0_38, %c0_39] : memref<1x8x3x128xbf16, #tpu.memory_space<vmem>>, vector<1x1x3x128xbf16>
    %33 = vector.shape_cast %32 : vector<1x1x3x128xbf16> to vector<3x128xbf16>
    %cst_40 = arith.constant dense<0.000000e+00> : vector<32x128xf32>
    %34 = tpu.matmul %0, %33, %cst_40 {dimension_numbers = #tpu.dot_dimension_numbers<[1], [0], [0], [1], [0, 0, 1, 1], [], []>} : vector<32x3xbf16>, vector<3x128xbf16>, vector<32x128xf32> -> vector<32x128xf32>
    %35 = arith.maximumf %31, %34 : vector<32x128xf32>
    %36 = vector.broadcast %1 : vector<32x1xf32> to vector<32x128xf32>
    %37 = arith.addf %35, %36 : vector<32x128xf32>
    %cst_41 = arith.constant 0.000000e+00 : f32
    %38 = vector.broadcast %cst_41 : f32 to vector<32x128xf32>
    %39 = arith.cmpf oge, %37, %38 : vector<32x128xf32>
    %cst_42 = arith.constant 2.000000e-01 : f32
    %40 = vector.broadcast %cst_42 : f32 to vector<32x128xf32>
    %41 = arith.mulf %40, %37 : vector<32x128xf32>
    %42 = arith.select %39, %37, %41 : vector<32x128xi1>, vector<32x128xf32>
    %c0_43 = arith.constant 0 : index
    %c0_44 = arith.constant 0 : index
    %43 = vector.load %arg5[%c0_43, %c0_44] : memref<32x3xbf16, #tpu.memory_space<vmem>>, vector<32x3xbf16>
    %c0_45 = arith.constant 0 : index
    %c0_46 = arith.constant 0 : index
    %c0_47 = arith.constant 0 : index
    %44 = vector.load %arg3[%c0_45, %c0_46, %c0_47] : memref<1x3x128xbf16, #tpu.memory_space<vmem>>, vector<1x3x128xbf16>
    %45 = vector.shape_cast %44 : vector<1x3x128xbf16> to vector<3x128xbf16>
    %cst_48 = arith.constant dense<0.000000e+00> : vector<32x128xf32>
    %46 = tpu.matmul %43, %45, %cst_48 {dimension_numbers = #tpu.dot_dimension_numbers<[1], [0], [0], [1], [0, 0, 1, 1], [], []>} : vector<32x3xbf16>, vector<3x128xbf16>, vector<32x128xf32> -> vector<32x128xf32>
    %47 = vector.broadcast %2 : vector<32x1xf32> to vector<32x128xf32>
    %48 = arith.addf %46, %47 : vector<32x128xf32>
    %cst_49 = arith.constant 0.000000e+00 : f32
    %49 = vector.broadcast %cst_49 : f32 to vector<32x128xf32>
    %50 = arith.cmpf oge, %48, %49 : vector<32x128xf32>
    %cst_50 = arith.constant 2.000000e-01 : f32
    %51 = vector.broadcast %cst_50 : f32 to vector<32x128xf32>
    %52 = arith.mulf %51, %48 : vector<32x128xf32>
    %53 = arith.select %50, %48, %52 : vector<32x128xi1>, vector<32x128xf32>
    %54 = arith.addf %42, %53 : vector<32x128xf32>
    %55 = arith.truncf %54 : vector<32x128xf32> to vector<32x128xbf16>
    %c0_51 = arith.constant 0 : index
    %c0_52 = arith.constant 0 : index
    %56 = vector.load %arg6[%c0_51, %c0_52] : memref<32x32xbf16, #tpu.memory_space<vmem>>, vector<32x32xbf16>
    %cst_53 = arith.constant dense<0.000000e+00> : vector<32x128xf32>
    %57 = tpu.matmul %56, %55, %cst_53 {dimension_numbers = #tpu.dot_dimension_numbers<[1], [0], [0], [1], [0, 0, 1, 1], [], []>} : vector<32x32xbf16>, vector<32x128xbf16>, vector<32x128xf32> -> vector<32x128xf32>
    %58 = vector.broadcast %4 : vector<32x1xf32> to vector<32x128xf32>
    %59 = arith.addf %57, %58 : vector<32x128xf32>
    %c0_54 = arith.constant 0 : index
    %c0_55 = arith.constant 0 : index
    %60 = vector.load %arg7[%c0_54, %c0_55] : memref<32x32xbf16, #tpu.memory_space<vmem>>, vector<32x32xbf16>
    %61 = arith.truncf %59 : vector<32x128xf32> to vector<32x128xbf16>
    %cst_56 = arith.constant dense<0.000000e+00> : vector<32x128xf32>
    %62 = tpu.matmul %60, %61, %cst_56 {dimension_numbers = #tpu.dot_dimension_numbers<[1], [0], [0], [1], [0, 0, 1, 1], [], []>} : vector<32x32xbf16>, vector<32x128xbf16>, vector<32x128xf32> -> vector<32x128xf32>
    %63 = vector.broadcast %3 : vector<32x1xf32> to vector<32x128xf32>
    %64 = arith.addf %62, %63 : vector<32x128xf32>
    %65 = arith.negf %64 : vector<32x128xf32>
    %66 = math.exp %65 : vector<32x128xf32>
    %cst_57 = arith.constant 1.000000e+00 : f32
    %67 = vector.broadcast %cst_57 : f32 to vector<32x128xf32>
    %68 = arith.addf %67, %66 : vector<32x128xf32>
    %69 = arith.divf %67, %68 : vector<32x128xf32>
    %70 = arith.subf %42, %53 : vector<32x128xf32>
    %71 = arith.mulf %69, %70 : vector<32x128xf32>
    %72 = arith.addf %53, %71 : vector<32x128xf32>
    %73 = arith.truncf %72 : vector<32x128xf32> to vector<32x128xbf16>
    %c0_58 = arith.constant 0 : index
    %c0_59 = arith.constant 0 : index
    %c0_60 = arith.constant 0 : index
    %74 = vector.load %arg9[%c0_58, %c0_59, %c0_60] : memref<1x32x128xbf16, #tpu.memory_space<vmem>>, vector<1x32x128xbf16>
    %75 = vector.shape_cast %74 : vector<1x32x128xbf16> to vector<32x128xbf16>
    %76 = vector.shape_cast %73 : vector<32x128xbf16> to vector<1x32x128xbf16>
    tpu.vector_store %arg9[%c0_58, %c0_59, %c0_60], %76 {strides = array<i32>} : memref<1x32x128xbf16, #tpu.memory_space<vmem>>, vector<1x32x128xbf16>,
    return
  }
  func.func @transform_0(%arg0: i32, %arg1: i32) -> (i32, i32, i32, i32) {
    %c0_i32 = arith.constant 0 : i32
    %c0_i32_0 = arith.constant 0 : i32
    %c0_i32_1 = arith.constant 0 : i32
    return %arg0, %c0_i32, %c0_i32_0, %arg1 : i32, i32, i32, i32
  }
  func.func @transform_1(%arg0: i32, %arg1: i32) -> (i32, i32, i32) {
    %c0_i32 = arith.constant 0 : i32
    %c0_i32_0 = arith.constant 0 : i32
    return %arg0, %c0_i32, %arg1 : i32, i32, i32
  }
  func.func @transform_2(%arg0: i32, %arg1: i32) -> (i32, i32) {
    %c0_i32 = arith.constant 0 : i32
    %c0_i32_0 = arith.constant 0 : i32
    %c0_i32_1 = arith.constant 0 : i32
    return %c0_i32, %c0_i32_0 : i32, i32
  }
  func.func @transform_3(%arg0: i32, %arg1: i32) -> (i32, i32) {
    %c0_i32 = arith.constant 0 : i32
    %c0_i32_0 = arith.constant 0 : i32
    %c0_i32_1 = arith.constant 0 : i32
    return %c0_i32, %c0_i32_0 : i32, i32
  }
  func.func @transform_4(%arg0: i32, %arg1: i32) -> (i32, i32) {
    %c0_i32 = arith.constant 0 : i32
    %c0_i32_0 = arith.constant 0 : i32
    %c0_i32_1 = arith.constant 0 : i32
    return %c0_i32, %c0_i32_0 : i32, i32
  }
  func.func @transform_5(%arg0: i32, %arg1: i32) -> (i32, i32) {
    %c0_i32 = arith.constant 0 : i32
    %c0_i32_0 = arith.constant 0 : i32
    %c0_i32_1 = arith.constant 0 : i32
    return %c0_i32, %c0_i32_0 : i32, i32
  }
  func.func @transform_6(%arg0: i32, %arg1: i32) -> (i32, i32) {
    %c0_i32 = arith.constant 0 : i32
    %c0_i32_0 = arith.constant 0 : i32
    %c0_i32_1 = arith.constant 0 : i32
    return %c0_i32, %c0_i32_0 : i32, i32
  }
  func.func @transform_7(%arg0: i32, %arg1: i32) -> (i32, i32, i32) {
    %c0_i32 = arith.constant 0 : i32
    %c0_i32_0 = arith.constant 0 : i32
    return %arg0, %c0_i32, %arg1 : i32, i32, i32
  }
}

</mosaic_0001>

<llo_original>
// kernel: lgfa_forward_pallas.1
$region0: #{lgfa_forward_pallas.1}
  #allocation0 [shape = 'u32[]', space=smem, size = 0x4, offset = 0x4, fixed_abs, tag = 'smem constant byte address 0x4 - core index']
  #allocation1 [shape = 'u32[72,128]{1,0:T(1,128)}', space=vmem, size = 0x9000, scoped, tag = 'internal scratch']
  %s0 = inlined_call_operand.vmem [shape: bf16[2,8,3,128], index: 0, kind: input, shape index: {}]
  %s1 = inlined_call_operand.vmem [shape: bf16[2,3,128], index: 1, kind: input, shape index: {}]
  %s2 = inlined_call_operand.vmem [shape: bf16[32,3], index: 2, kind: input, shape index: {}]
  %s3 = inlined_call_operand.vmem [shape: bf16[32,3], index: 3, kind: input, shape index: {}]
  %s4 = inlined_call_operand.vmem [shape: bf16[32,32], index: 4, kind: input, shape index: {}]
  %s5 = inlined_call_operand.vmem [shape: bf16[32,32], index: 5, kind: input, shape index: {}]
  %s6 = inlined_call_operand.vmem [shape: f32[32,4], index: 6, kind: input, shape index: {}]
  %s7 = inlined_call_operand.vmem [shape: bf16[2,32,128], index: 7, kind: output, shape index: {}]
  %s8 = sld [smem:[#allocation0]]
  $region61: #{lgfa_forward_pallas.1} parent=0
    _
  %s10 = ssub.s32 1, %s8
  %s11 = scalar_select 0, %s10, %s8
  loop: start=0, step=1, limit=4
  $region2: #{lgfa_forward_pallas.1} parent=0 // loop_pre_header
    _
  $region3: #{lgfa_forward_pallas.1} parent=0 // loop_header
    %s13 = sphi 0, %s17
    %p14 = scmp.ge.s32.totalorder %s13, 4
    %s20 = sphi 0, %s32
    %s21 = sphi 0, %s28
    %s22 = sphi 0, %s20
    %s23 = sphi 0, %s21
    %s24 = sphi 0, %s22
    %s25 = sphi 0, %s23
    %s37 = sphi 0, %s39
    %s40 = sphi 0, %s37
    %s41 = sphi 0, %s40
    %s57 = sphi 0, %s41
    %s65 = sphi 0, %s67
    %s68 = sphi 0, %s65
    %s69 = sphi 0, %s68
    %s85 = sphi 0, %s69
    %s89 = sphi 0, %s89
    %s91 = sphi 0, %s89
    %s92 = sphi 0, %s91
    %s106 = sphi 0, %s92
    %s110 = sphi 0, %s110
    %s112 = sphi 0, %s110
    %s113 = sphi 0, %s112
    %s127 = sphi 0, %s113
    %s131 = sphi 0, %s131
    %s133 = sphi 0, %s131
    %s134 = sphi 0, %s133
    %s148 = sphi 0, %s134
    %s152 = sphi 0, %s152
    %s154 = sphi 0, %s152
    %s155 = sphi 0, %s154
    %s169 = sphi 0, %s155
    %s173 = sphi 0, %s173
    %s175 = sphi 0, %s173
    %s176 = sphi 0, %s175
    %s190 = sphi 0, %s176
    %s198 = sphi 0, %s200
    %s201 = sphi 0, %s198
    %s202 = sphi 0, %s201
    %s218 = sphi 0, %s202
  $region4: #{lgfa_forward_pallas.1} parent=0 // loop_header_branch
    %16 = sbr.rel (%p14) target = $region8
  $region5: #{lgfa_forward_pallas.1} parent=0 // loop_body
    %s18 = ssub.s32 %s13, 1
    %s19 = ssub.s32 %s13, 2
    %s26 = sadd.s32 1, %s21
    %p27 = scmp.ge.s32.totalorder %s26, 1
    %s28 = scalar_select %p27, 0, %s26
    %s29 = sadd.s32 1, %s20
    %s30 = scalar_select %p27, %s29, %s20
    %p31 = scmp.ge.s32.totalorder %s30, 2
    %s32 = scalar_select %p31, 0, %s30
    %s33 = ssub.s32 %s20, %s32
    %s34 = ssub.s32 %s21, %s28
    %s35 = sor.u32 %s33, %s34
    %p36 = scmp.eq.s32.totalorder %s35, 0
    %s38 = sadd.s32 %s37, 1
    %s39 = scalar_select %p36, %s37, %s38
    %p42 = pneg %p36
    %p43 = scmp.eq.s32.totalorder %s13, 1
    %p44 = por %p42, %p43
    %p45 = scmp.ne.s32.totalorder %s37, %s40
    %p46 = scmp.eq.s32.totalorder %s13, 0
    %p47 = por %p45, %p46
    %p48 = scmp.ne.s32.totalorder %s37, %s40
    %p49 = scmp.eq.s32.totalorder %s18, 1
    %p50 = por %p48, %p49
    %p51 = scmp.ne.s32.totalorder %s40, %s41
    %p52 = scmp.eq.s32.totalorder %s18, 0
    %p53 = por %p51, %p52
    %p54 = scmp.ne.s32.totalorder %s40, %s41
    %p55 = scmp.eq.s32.totalorder %s19, 1
    %p56 = por %p54, %p55
    %p58 = scmp.ne.s32.totalorder %s41, %s57
    %p59 = scmp.eq.s32.totalorder %s19, 0
    %p60 = por %p58, %p59
    %s61 = ssub.s32 %s20, %s32
    %s62 = ssub.s32 %s21, %s28
    %s63 = sor.u32 %s61, %s62
    %p64 = scmp.eq.s32.totalorder %s63, 0
    %s66 = sadd.s32 %s65, 1
    %s67 = scalar_select %p64, %s65, %s66
    %p70 = pneg %p64
    %p71 = scmp.eq.s32.totalorder %s13, 1
    %p72 = por %p70, %p71
    %p73 = scmp.ne.s32.totalorder %s65, %s68
    %p74 = scmp.eq.s32.totalorder %s13, 0
    %p75 = por %p73, %p74
    %p76 = scmp.ne.s32.totalorder %s65, %s68
    %p77 = scmp.eq.s32.totalorder %s18, 1
    %p78 = por %p76, %p77
    %p79 = scmp.ne.s32.totalorder %s68, %s69
    %p80 = scmp.eq.s32.totalorder %s18, 0
    %p81 = por %p79, %p80
    %p82 = scmp.ne.s32.totalorder %s68, %s69
    %p83 = scmp.eq.s32.totalorder %s19, 1
    %p84 = por %p82, %p83
    %p86 = scmp.ne.s32.totalorder %s69, %s85
    %p87 = scmp.eq.s32.totalorder %s19, 0
    %p88 = por %p86, %p87
    %s90 = sadd.s32 %s89, 1
    %p93 = scmp.eq.s32.totalorder %s13, 1
    %p94 = scmp.ne.s32.totalorder %s89, %s91
    %p95 = scmp.eq.s32.totalorder %s13, 0
    %p96 = por %p94, %p95
    %p97 = scmp.ne.s32.totalorder %s89, %s91
    %p98 = scmp.eq.s32.totalorder %s18, 1
    %p99 = por %p97, %p98
    %p100 = scmp.ne.s32.totalorder %s91, %s92
    %p101 = scmp.eq.s32.totalorder %s18, 0
    %p102 = por %p100, %p101
    %p103 = scmp.ne.s32.totalorder %s91, %s92
    %p104 = scmp.eq.s32.totalorder %s19, 1
    %p105 = por %p103, %p104
    %p107 = scmp.ne.s32.totalorder %s92, %s106
    %p108 = scmp.eq.s32.totalorder %s19, 0
    %p109 = por %p107, %p108
    %s111 = sadd.s32 %s110, 1
    %p114 = scmp.eq.s32.totalorder %s13, 1
    %p115 = scmp.ne.s32.totalorder %s110, %s112
    %p116 = scmp.eq.s32.totalorder %s13, 0
    %p117 = por %p115, %p116
    %p118 = scmp.ne.s32.totalorder %s110, %s112
    %p119 = scmp.eq.s32.totalorder %s18, 1
    %p120 = por %p118, %p119
    %p121 = scmp.ne.s32.totalorder %s112, %s113
    %p122 = scmp.eq.s32.totalorder %s18, 0
    %p123 = por %p121, %p122
    %p124 = scmp.ne.s32.totalorder %s112, %s113
    %p125 = scmp.eq.s32.totalorder %s19, 1
    %p126 = por %p124, %p125
    %p128 = scmp.ne.s32.totalorder %s113, %s127
    %p129 = scmp.eq.s32.totalorder %s19, 0
    %p130 = por %p128, %p129
    %s132 = sadd.s32 %s131, 1
    %p135 = scmp.eq.s32.totalorder %s13, 1
    %p136 = scmp.ne.s32.totalorder %s131, %s133
    %p137 = scmp.eq.s32.totalorder %s13, 0
    %p138 = por %p136, %p137
    %p139 = scmp.ne.s32.totalorder %s131, %s133
    %p140 = scmp.eq.s32.totalorder %s18, 1
    %p141 = por %p139, %p140
    %p142 = scmp.ne.s32.totalorder %s133, %s134
    %p143 = scmp.eq.s32.totalorder %s18, 0
    %p144 = por %p142, %p143
    %p145 = scmp.ne.s32.totalorder %s133, %s134
    %p146 = scmp.eq.s32.totalorder %s19, 1
    %p147 = por %p145, %p146
    %p149 = scmp.ne.s32.totalorder %s134, %s148
    %p150 = scmp.eq.s32.totalorder %s19, 0
    %p151 = por %p149, %p150
    %s153 = sadd.s32 %s152, 1
    %p156 = scmp.eq.s32.totalorder %s13, 1
    %p157 = scmp.ne.s32.totalorder %s152, %s154
    %p158 = scmp.eq.s32.totalorder %s13, 0
    %p159 = por %p157, %p158
    %p160 = scmp.ne.s32.totalorder %s152, %s154
    %p161 = scmp.eq.s32.totalorder %s18, 1
    %p162 = por %p160, %p161
    %p163 = scmp.ne.s32.totalorder %s154, %s155
    %p164 = scmp.eq.s32.totalorder %s18, 0
    %p165 = por %p163, %p164
    %p166 = scmp.ne.s32.totalorder %s154, %s155
    %p167 = scmp.eq.s32.totalorder %s19, 1
    %p168 = por %p166, %p167
    %p170 = scmp.ne.s32.totalorder %s155, %s169
    %p171 = scmp.eq.s32.totalorder %s19, 0
    %p172 = por %p170, %p171
    %s174 = sadd.s32 %s173, 1
    %p177 = scmp.eq.s32.totalorder %s13, 1
    %p178 = scmp.ne.s32.totalorder %s173, %s175
    %p179 = scmp.eq.s32.totalorder %s13, 0
    %p180 = por %p178, %p179
    %p181 = scmp.ne.s32.totalorder %s173, %s175
    %p182 = scmp.eq.s32.totalorder %s18, 1
    %p183 = por %p181, %p182
    %p184 = scmp.ne.s32.totalorder %s175, %s176
    %p185 = scmp.eq.s32.totalorder %s18, 0
    %p186 = por %p184, %p185
    %p187 = scmp.ne.s32.totalorder %s175, %s176
    %p188 = scmp.eq.s32.totalorder %s19, 1
    %p189 = por %p187, %p188
    %p191 = scmp.ne.s32.totalorder %s176, %s190
    %p192 = scmp.eq.s32.totalorder %s19, 0
    %p193 = por %p191, %p192
    %s194 = ssub.s32 %s20, %s32
    %s195 = ssub.s32 %s21, %s28
    %s196 = sor.u32 %s194, %s195
    %p197 = scmp.eq.s32.totalorder %s196, 0
    %s199 = sadd.s32 %s198, 1
    %s200 = scalar_select %p197, %s198, %s199
    %p203 = pneg %p197
    %p204 = scmp.eq.s32.totalorder %s13, 1
    %p205 = por %p203, %p204
    %p206 = scmp.ne.s32.totalorder %s198, %s201
    %p207 = scmp.eq.s32.totalorder %s13, 0
    %p208 = por %p206, %p207
    %p209 = scmp.ne.s32.totalorder %s198, %s201
    %p210 = scmp.eq.s32.totalorder %s18, 1
    %p211 = por %p209, %p210
    %p212 = scmp.ne.s32.totalorder %s201, %s202
    %p213 = scmp.eq.s32.totalorder %s18, 0
    %p214 = por %p212, %p213
    %p215 = scmp.ne.s32.totalorder %s201, %s202
    %p216 = scmp.eq.s32.totalorder %s19, 1
    %p217 = por %p215, %p216
    %p219 = scmp.ne.s32.totalorder %s202, %s218
    %p220 = scmp.eq.s32.totalorder %s19, 0
    %p221 = por %p219, %p220
    %p222 = scmp.le.s32.totalorder 1, %s13
    %p223 = scmp.lt.s32.totalorder %s13, 3
    %p224 = pnand %p222, %p223
    %p225 = pneg %p224
    // Predicated region
    $region9: #{lgfa_forward_pallas.1} parent=5 // pred_check
      _
    $region10: #{lgfa_forward_pallas.1} parent=5 // pred_check_branch
      %227 = sbr.rel (%p224) target = $region12
    $region11: #{lgfa_forward_pallas.1} parent=5 // pred_region
      %s228 = ssub.s32 %s13, 1
      // Predicated region
      $region13: #{lgfa_forward_pallas.1} parent=11 // pred_check
        %p229 = pneg %p102
      $region14: #{lgfa_forward_pallas.1} parent=11 // pred_check_branch
        %231 = sbr.rel (%p229) target = $region16
      $region15: #{lgfa_forward_pallas.1} parent=11 // pred_region
        _
      $region16: #{lgfa_forward_pallas.1} parent=11 // pred_fallthru
        _
      // Predicated region
      $region17: #{lgfa_forward_pallas.1} parent=11 // pred_check
        %p232 = pneg %p123
      $region18: #{lgfa_forward_pallas.1} parent=11 // pred_check_branch
        %234 = sbr.rel (%p232) target = $region20
      $region19: #{lgfa_forward_pallas.1} parent=11 // pred_region
        _
      $region20: #{lgfa_forward_pallas.1} parent=11 // pred_fallthru
        _
      // Predicated region
      $region21: #{lgfa_forward_pallas.1} parent=11 // pred_check
        %p235 = pneg %p144
      $region22: #{lgfa_forward_pallas.1} parent=11 // pred_check_branch
        %237 = sbr.rel (%p235) target = $region24
      $region23: #{lgfa_forward_pallas.1} parent=11 // pred_region
        _
      $region24: #{lgfa_forward_pallas.1} parent=11 // pred_fallthru
        _
      // Predicated region
      $region25: #{lgfa_forward_pallas.1} parent=11 // pred_check
        %p238 = pneg %p165
      $region26: #{lgfa_forward_pallas.1} parent=11 // pred_check_branch
        %240 = sbr.rel (%p238) target = $region28
      $region27: #{lgfa_forward_pallas.1} parent=11 // pred_region
        _
      $region28: #{lgfa_forward_pallas.1} parent=11 // pred_fallthru
        _
      // Predicated region
      $region29: #{lgfa_forward_pallas.1} parent=11 // pred_check
        %p241 = pneg %p186
      $region30: #{lgfa_forward_pallas.1} parent=11 // pred_check_branch
        %243 = sbr.rel (%p241) target = $region32
      $region31: #{lgfa_forward_pallas.1} parent=11 // pred_region
        _
      $region32: #{lgfa_forward_pallas.1} parent=11 // pred_fallthru
        _
    $region12: #{lgfa_forward_pallas.1} parent=5 // pred_fallthru
      _
    %p244 = scmp.lt.s32.totalorder %s13, 2
    // Predicated region
    $region33: #{lgfa_forward_pallas.1} parent=5 // pred_check
      %p245 = pneg %p244
    $region34: #{lgfa_forward_pallas.1} parent=5 // pred_check_branch
      %247 = sbr.rel (%p245) target = $region36
    $region35: #{lgfa_forward_pallas.1} parent=5 // pred_region
      // Predicated region
      $region37: #{lgfa_forward_pallas.1} parent=35 // pred_check
        %p248 = pneg %p47
      $region38: #{lgfa_forward_pallas.1} parent=35 // pred_check_branch
        %250 = sbr.rel (%p248) target = $region40
      $region39: #{lgfa_forward_pallas.1} parent=35 // pred_region
        %p251 = scmp.lt.s32.totalorder %s20, 1
        %s252 = scalar_select %p251, %s20, 1
        %p253 = scmp.lt.s32.totalorder %s21, 0
        %s254 = scalar_select %p253, %s21, 0
        %s255 = smul.addr %s252, 8
        %s256 = sadd.s32 %s254, %s255
        %s257 = smul.addr %s256, 2
        %s258 = scalar_lea.vmem %s0, %s257
      $region40: #{lgfa_forward_pallas.1} parent=35 // pred_fallthru
        _
      // Predicated region
      $region41: #{lgfa_forward_pallas.1} parent=35 // pred_check
        %p259 = pneg %p75
      $region42: #{lgfa_forward_pallas.1} parent=35 // pred_check_branch
        %261 = sbr.rel (%p259) target = $region44
      $region43: #{lgfa_forward_pallas.1} parent=35 // pred_region
        %p262 = scmp.lt.s32.totalorder %s20, 1
        %s263 = scalar_select %p262, %s20, 1
        %p264 = scmp.lt.s32.totalorder %s21, 0
        %s265 = scalar_select %p264, %s21, 0
        %s266 = sadd.s32 %s265, %s263
        %s267 = smul.addr %s266, 2
        %s268 = scalar_lea.vmem %s1, %s267
      $region44: #{lgfa_forward_pallas.1} parent=35 // pred_fallthru
        _
    $region36: #{lgfa_forward_pallas.1} parent=5 // pred_fallthru
      _
    %p269 = scmp.le.s32.totalorder 1, %s13
    %p270 = scmp.lt.s32.totalorder %s13, 3
    %p271 = pnand %p269, %p270
    %p272 = pneg %p271
    // Predicated region
    $region45: #{lgfa_forward_pallas.1} parent=5 // pred_check
      _
    $region46: #{lgfa_forward_pallas.1} parent=5 // pred_check_branch
      %274 = sbr.rel (%p271) target = $region48
    $region47: #{lgfa_forward_pallas.1} parent=5 // pred_region
      %s275 = ssub.s32 %s13, 1
      %p276 = scmp.lt.s32.totalorder %s22, 1
      %s277 = scalar_select %p276, %s22, 1
      %p278 = scmp.lt.s32.totalorder %s23, 0
      %s279 = scalar_select %p278, %s23, 0
      %s280 = smul.addr %s277, 8
      %s281 = sadd.s32 %s279, %s280
      %s282 = smul.addr %s281, 2
      %s283 = scalar_lea.vmem %s0, %s282
      %p284 = pneg %p53
      %p285 = pneg %p50
      %p286 = scmp.lt.s32.totalorder %s22, 1
      %s287 = scalar_select %p286, %s22, 1
      %p288 = scmp.lt.s32.totalorder %s23, 0
      %s289 = scalar_select %p288, %s23, 0
      %s290 = sadd.s32 %s289, %s287
      %s291 = smul.addr %s290, 2
      %s292 = scalar_lea.vmem %s1, %s291
      %p293 = pneg %p81
      %p294 = pneg %p78
      %p295 = pneg %p102
      %p296 = pneg %p99
      %p297 = pneg %p123
      %p298 = pneg %p120
      %p299 = pneg %p144
      %p300 = pneg %p141
      %p301 = pneg %p165
      %p302 = pneg %p162
      %p303 = pneg %p186
      %p304 = pneg %p183
      %p305 = pneg %p214
      %p306 = pneg %p211
      %p307 = scmp.lt.s32.totalorder %s22, 1
      %s308 = scalar_select %p307, %s22, 1
      %p309 = scmp.lt.s32.totalorder %s23, 0
      %s310 = scalar_select %p309, %s23, 0
      %s311 = smul.addr %s308, 4
      %s312 = sadd.s32 %s310, %s311
      %s313 = smul.addr %s312, 4
      %s314 = scalar_lea.vmem %s7, %s313
      %p315 = scmp.lt.s32.totalorder %s22, 1
      %s316 = scalar_select %p315, %s22, 1
      %p317 = scmp.lt.s32.totalorder %s23, 0
      %s318 = scalar_select %p317, %s23, 0
      %s319 = smul.addr %s316, 8
      %s320 = sadd.s32 %s318, %s319
      %s321 = smul.addr %s320, 2
      %s322 = scalar_lea.vmem %s0, %s321
      %p323 = scmp.lt.s32.totalorder %s22, 1
      %s324 = scalar_select %p323, %s22, 1
      %p325 = scmp.lt.s32.totalorder %s23, 0
      %s326 = scalar_select %p325, %s23, 0
      %s327 = sadd.s32 %s326, %s324
      %s328 = smul.addr %s327, 2
      %s329 = scalar_lea.vmem %s1, %s328
      %p330 = scmp.lt.s32.totalorder %s22, 1
      %s331 = scalar_select %p330, %s22, 1
      %p332 = scmp.lt.s32.totalorder %s23, 0
      %s333 = scalar_select %p332, %s23, 0
      %s334 = smul.addr %s331, 4
      %s335 = sadd.s32 %s333, %s334
      %s336 = smul.addr %s335, 4
      %s337 = scalar_lea.vmem %s7, %s336
      %v339 = vld [vmem:[%s2] sm:$0xf]
      %v340 = vld [vmem:[%s2 + $0x4] sm:$0xf]
      %v341 = vld [vmem:[%s2 + $0x8] sm:$0xf]
      %v342 = vld [vmem:[%s2 + $0xc] sm:$0xf]
      %v343 = vld [vmem:[%s6] sm:$0xff]
      %v344 = vld [vmem:[%s6 + $0x8] sm:$0xff]
      %v345 = vld [vmem:[%s6 + $0x10] sm:$0xff]
      %v346 = vld [vmem:[%s6 + $0x18] sm:$0xff]
      %v347 = vld [vmem:[%s322] sm:$0x3]
      %v352 = vunpack.c.l.b16 %v339
      %v353 = vunpack.c.l.b16 %v340
      %v354 = vunpack.c.l.b16 %v341
      %v355 = vunpack.c.l.b16 %v342
      %v356 = vpack.c.b16 %v353, %v352
      %v357 = vpack.c.b16 %v355, %v354
      %vm358 = vcmask 23552
      %v360 = vsel %vm358, %v356, 0
      %v363 = vsel %vm358, %v357, 0
      %vm365 = vcmask 1040384
      %vm366 = vcmask 1041408
      %v367 = vsel %vm365, 4294967295, 65535
      %v368 = vsel %vm366, %v367, 0
      %v370 = vand.u32 %v347, %v368
      %372 = vmatpush.bf16.msra.mxu0 0
      %373 = vmatpush.bf16.msra.mxu0 0
      %374 = vmatpush.bf16.msra.mxu0 0
      %375 = vmatpush.bf16.msra.mxu0 0
      %376 = vmatpush.bf16.msra.mxu0 0
      %377 = vmatpush.bf16.msra.mxu0 0
      %378 = vmatpush.bf16.msra.mxu0 0
      %379 = vmatpush.bf16.msra.mxu0 %v370
      %380 = vmatmul.bf16.gmra.mxu0 %v360
      %v381 = vpop.f32.mrf.mxu0
      %v382 = vadd.f32 0.0, %v381
      %v383 = vpop.f32.mrf.mxu0
      %v384 = vadd.f32 0.0, %v383
      %385 = vmatmul.bf16.gmra.mxu0 %v363
      %v386 = vpop.f32.mrf.mxu0
      %v387 = vadd.f32 0.0, %v386
      %v388 = vpop.f32.mrf.mxu0
      %v389 = vadd.f32 0.0, %v388
      %390 = vdwg.mxu0
      %s391 = scalar_lea.vmem %s322, 2
      %v392 = vld [vmem:[%s391] sm:$0x3]
      %v394 = vand.u32 %v392, %v368
      %396 = vmatpush.bf16.msra.mxu0 0
      %397 = vmatpush.bf16.msra.mxu0 0
      %398 = vmatpush.bf16.msra.mxu0 0
      %399 = vmatpush.bf16.msra.mxu0 0
      %400 = vmatpush.bf16.msra.mxu0 0
      %401 = vmatpush.bf16.msra.mxu0 0
      %402 = vmatpush.bf16.msra.mxu0 0
      %403 = vmatpush.bf16.msra.mxu0 %v394
      %404 = vmatmul.bf16.gmra.mxu0 %v360
      %v405 = vpop.f32.mrf.mxu0
      %v406 = vadd.f32 0.0, %v405
      %v407 = vpop.f32.mrf.mxu0
      %v408 = vadd.f32 0.0, %v407
      %409 = vmatmul.bf16.gmra.mxu0 %v363
      %v410 = vpop.f32.mrf.mxu0
      %v411 = vadd.f32 0.0, %v410
      %v412 = vpop.f32.mrf.mxu0
      %v413 = vadd.f32 0.0, %v412
      %414 = vdwg.mxu0
      %v415 = vmax.f32 %v382, %v406
      %v416 = vmax.f32 %v384, %v408
      %v417 = vmax.f32 %v387, %v411
      %v418 = vmax.f32 %v389, %v413
      %s419 = scalar_lea.vmem %s322, 4
      %v420 = vld [vmem:[%s419] sm:$0x3]
      %v422 = vand.u32 %v420, %v368
      %424 = vmatpush.bf16.msra.mxu0 0
      %425 = vmatpush.bf16.msra.mxu0 0
      %426 = vmatpush.bf16.msra.mxu0 0
      %427 = vmatpush.bf16.msra.mxu0 0
      %428 = vmatpush.bf16.msra.mxu0 0
      %429 = vmatpush.bf16.msra.mxu0 0
      %430 = vmatpush.bf16.msra.mxu0 0
      %431 = vmatpush.bf16.msra.mxu0 %v422
      %432 = vmatmul.bf16.gmra.mxu0 %v360
      %v433 = vpop.f32.mrf.mxu0
      %v434 = vadd.f32 0.0, %v433
      %v435 = vpop.f32.mrf.mxu0
      %v436 = vadd.f32 0.0, %v435
      %437 = vmatmul.bf16.gmra.mxu0 %v363
      %v438 = vpop.f32.mrf.mxu0
      %v439 = vadd.f32 0.0, %v438
      %v440 = vpop.f32.mrf.mxu0
      %v441 = vadd.f32 0.0, %v440
      %442 = vdwg.mxu0
      %v443 = vmax.f32 %v415, %v434
      %v444 = vmax.f32 %v416, %v436
      %v445 = vmax.f32 %v417, %v439
      %v446 = vmax.f32 %v418, %v441
      %s447 = scalar_lea.vmem %s322, 6
      %v448 = vld [vmem:[%s447] sm:$0x3]
      %v450 = vand.u32 %v448, %v368
      %452 = vmatpush.bf16.msra.mxu0 0
      %453 = vmatpush.bf16.msra.mxu0 0
      %454 = vmatpush.bf16.msra.mxu0 0
      %455 = vmatpush.bf16.msra.mxu0 0
      %456 = vmatpush.bf16.msra.mxu0 0
      %457 = vmatpush.bf16.msra.mxu0 0
      %458 = vmatpush.bf16.msra.mxu0 0
      %459 = vmatpush.bf16.msra.mxu0 %v450
      %460 = vmatmul.bf16.gmra.mxu0 %v360
      %v461 = vpop.f32.mrf.mxu0
      %v462 = vadd.f32 0.0, %v461
      %v463 = vpop.f32.mrf.mxu0
      %v464 = vadd.f32 0.0, %v463
      %465 = vmatmul.bf16.gmra.mxu0 %v363
      %v466 = vpop.f32.mrf.mxu0
      %v467 = vadd.f32 0.0, %v466
      %v468 = vpop.f32.mrf.mxu0
      %v469 = vadd.f32 0.0, %v468
      %470 = vdwg.mxu0
      %v471 = vmax.f32 %v443, %v462
      %v472 = vmax.f32 %v444, %v464
      %v473 = vmax.f32 %v445, %v467
      %v474 = vmax.f32 %v446, %v469
      %s475 = scalar_lea.vmem %s322, 8
      %v476 = vld [vmem:[%s475] sm:$0x3]
      %v478 = vand.u32 %v476, %v368
      %480 = vmatpush.bf16.msra.mxu0 0
      %481 = vmatpush.bf16.msra.mxu0 0
      %482 = vmatpush.bf16.msra.mxu0 0
      %483 = vmatpush.bf16.msra.mxu0 0
      %484 = vmatpush.bf16.msra.mxu0 0
      %485 = vmatpush.bf16.msra.mxu0 0
      %486 = vmatpush.bf16.msra.mxu0 0
      %487 = vmatpush.bf16.msra.mxu0 %v478
      %488 = vmatmul.bf16.gmra.mxu0 %v360
      %v489 = vpop.f32.mrf.mxu0
      %v490 = vadd.f32 0.0, %v489
      %v491 = vpop.f32.mrf.mxu0
      %v492 = vadd.f32 0.0, %v491
      %493 = vmatmul.bf16.gmra.mxu0 %v363
      %v494 = vpop.f32.mrf.mxu0
      %v495 = vadd.f32 0.0, %v494
      %v496 = vpop.f32.mrf.mxu0
      %v497 = vadd.f32 0.0, %v496
      %498 = vdwg.mxu0
      %v499 = vmax.f32 %v471, %v490
      %v500 = vmax.f32 %v472, %v492
      %v501 = vmax.f32 %v473, %v495
      %v502 = vmax.f32 %v474, %v497
      %s503 = scalar_lea.vmem %s322, 10
      %v504 = vld [vmem:[%s503] sm:$0x3]
      %v506 = vand.u32 %v504, %v368
      %508 = vmatpush.bf16.msra.mxu0 0
      %509 = vmatpush.bf16.msra.mxu0 0
      %510 = vmatpush.bf16.msra.mxu0 0
      %511 = vmatpush.bf16.msra.mxu0 0
      %512 = vmatpush.bf16.msra.mxu0 0
      %513 = vmatpush.bf16.msra.mxu0 0
      %514 = vmatpush.bf16.msra.mxu0 0
      %515 = vmatpush.bf16.msra.mxu0 %v506
      %516 = vmatmul.bf16.gmra.mxu0 %v360
      %v517 = vpop.f32.mrf.mxu0
      %v518 = vadd.f32 0.0, %v517
      %v519 = vpop.f32.mrf.mxu0
      %v520 = vadd.f32 0.0, %v519
      %521 = vmatmul.bf16.gmra.mxu0 %v363
      %v522 = vpop.f32.mrf.mxu0
      %v523 = vadd.f32 0.0, %v522
      %v524 = vpop.f32.mrf.mxu0
      %v525 = vadd.f32 0.0, %v524
      %526 = vdwg.mxu0
      %v527 = vmax.f32 %v499, %v518
      %v528 = vmax.f32 %v500, %v520
      %v529 = vmax.f32 %v501, %v523
      %v530 = vmax.f32 %v502, %v525
      %s531 = scalar_lea.vmem %s322, 12
      %v532 = vld [vmem:[%s531] sm:$0x3]
      %v534 = vand.u32 %v532, %v368
      %536 = vmatpush.bf16.msra.mxu0 0
      %537 = vmatpush.bf16.msra.mxu0 0
      %538 = vmatpush.bf16.msra.mxu0 0
      %539 = vmatpush.bf16.msra.mxu0 0
      %540 = vmatpush.bf16.msra.mxu0 0
      %541 = vmatpush.bf16.msra.mxu0 0
      %542 = vmatpush.bf16.msra.mxu0 0
      %543 = vmatpush.bf16.msra.mxu0 %v534
      %544 = vmatmul.bf16.gmra.mxu0 %v360
      %v545 = vpop.f32.mrf.mxu0
      %v546 = vadd.f32 0.0, %v545
      %v547 = vpop.f32.mrf.mxu0
      %v548 = vadd.f32 0.0, %v547
      %549 = vmatmul.bf16.gmra.mxu0 %v363
      %v550 = vpop.f32.mrf.mxu0
      %v551 = vadd.f32 0.0, %v550
      %v552 = vpop.f32.mrf.mxu0
      %v553 = vadd.f32 0.0, %v552
      %554 = vdwg.mxu0
      %v555 = vmax.f32 %v527, %v546
      %v556 = vmax.f32 %v528, %v548
      %v557 = vmax.f32 %v529, %v551
      %v558 = vmax.f32 %v530, %v553
      %s559 = scalar_lea.vmem %s322, 14
      %v560 = vld [vmem:[%s559] sm:$0x3]
      %v562 = vand.u32 %v560, %v368
      %564 = vmatpush.bf16.msra.mxu0 0
      %565 = vmatpush.bf16.msra.mxu0 0
      %566 = vmatpush.bf16.msra.mxu0 0
      %567 = vmatpush.bf16.msra.mxu0 0
      %568 = vmatpush.bf16.msra.mxu0 0
      %569 = vmatpush.bf16.msra.mxu0 0
      %570 = vmatpush.bf16.msra.mxu0 0
      %571 = vmatpush.bf16.msra.mxu0 %v562
      %572 = vmatmul.bf16.gmra.mxu0 %v360
      %v573 = vpop.f32.mrf.mxu0
      %v574 = vadd.f32 0.0, %v573
      %v575 = vpop.f32.mrf.mxu0
      %v576 = vadd.f32 0.0, %v575
      %577 = vmatmul.bf16.gmra.mxu0 %v363
      %v578 = vpop.f32.mrf.mxu0
      %v579 = vadd.f32 0.0, %v578
      %v580 = vpop.f32.mrf.mxu0
      %v581 = vadd.f32 0.0, %v580
      %582 = vdwg.mxu0
      %v583 = vmax.f32 %v555, %v574
      %v584 = vmax.f32 %v556, %v576
      %v585 = vmax.f32 %v557, %v579
      %v586 = vmax.f32 %v558, %v581
      %588 = vset.pattern.permute.xlu0 0
      %589 = vperm.xlu0 %588, %v343
      %v590 = vpop.permute.xlu0 %589
      %593 = vset.pattern.permute.xlu0 0
      %594 = vperm.xlu0 %593, %v344
      %v595 = vpop.permute.xlu0 %594
      %598 = vset.pattern.permute.xlu0 0
      %599 = vperm.xlu0 %598, %v345
      %v600 = vpop.permute.xlu0 %599
      %603 = vset.pattern.permute.xlu0 0
      %604 = vperm.xlu0 %603, %v346
      %v605 = vpop.permute.xlu0 %604
      %v607 = vadd.f32 %v583, %v590
      %v608 = vadd.f32 %v584, %v595
      %v609 = vadd.f32 %v585, %v600
      %v610 = vadd.f32 %v586, %v605
      %vm611 = vcmp.ge.f32.partialorder %v607, 0.0
      %vm612 = vcmp.ge.f32.partialorder %v608, 0.0
      %vm613 = vcmp.ge.f32.partialorder %v609, 0.0
      %vm614 = vcmp.ge.f32.partialorder %v610, 0.0
      %v615 = vmul.f32 %v607, 0.2
      %v616 = vmul.f32 %v608, 0.2
      %v617 = vmul.f32 %v609, 0.2
      %v618 = vmul.f32 %v610, 0.2
      %v619 = vsel %vm611, %v607, %v615
      %v620 = vsel %vm612, %v608, %v616
      %v621 = vsel %vm613, %v609, %v617
      %v622 = vsel %vm614, %v610, %v618
      %v623 = vld [vmem:[%s3] sm:$0xf]
      %v624 = vld [vmem:[%s3 + $0x4] sm:$0xf]
      %v625 = vld [vmem:[%s3 + $0x8] sm:$0xf]
      %v626 = vld [vmem:[%s3 + $0xc] sm:$0xf]
      %v627 = vld [vmem:[%s329] sm:$0x3]
      %628 = vset.pattern.permute.xlu0 1
      %629 = vperm.xlu0 %628, %v343
      %v630 = vpop.permute.xlu0 %629
      %632 = vset.pattern.permute.xlu0 1
      %633 = vperm.xlu0 %632, %v344
      %v634 = vpop.permute.xlu0 %633
      %636 = vset.pattern.permute.xlu0 1
      %637 = vperm.xlu0 %636, %v345
      %v638 = vpop.permute.xlu0 %637
      %640 = vset.pattern.permute.xlu0 1
      %641 = vperm.xlu0 %640, %v346
      %v642 = vpop.permute.xlu0 %641
      %v648 = vunpack.c.l.b16 %v623
      %v649 = vunpack.c.l.b16 %v624
      %v650 = vunpack.c.l.b16 %v625
      %v651 = vunpack.c.l.b16 %v626
      %v652 = vpack.c.b16 %v649, %v648
      %v653 = vpack.c.b16 %v651, %v650
      %v655 = vsel %vm358, %v652, 0
      %v658 = vsel %vm358, %v653, 0
      %v661 = vand.u32 %v627, %v368
      %663 = vmatpush.bf16.msra.mxu0 0
      %664 = vmatpush.bf16.msra.mxu0 0
      %665 = vmatpush.bf16.msra.mxu0 0
      %666 = vmatpush.bf16.msra.mxu0 0
      %667 = vmatpush.bf16.msra.mxu0 0
      %668 = vmatpush.bf16.msra.mxu0 0
      %669 = vmatpush.bf16.msra.mxu0 0
      %670 = vmatpush.bf16.msra.mxu0 %v661
      %671 = vmatmul.bf16.gmra.mxu0 %v655
      %v672 = vpop.f32.mrf.mxu0
      %v673 = vadd.f32 %v630, %v672
      %v674 = vpop.f32.mrf.mxu0
      %v675 = vadd.f32 %v634, %v674
      %676 = vmatmul.bf16.gmra.mxu0 %v658
      %v677 = vpop.f32.mrf.mxu0
      %v678 = vadd.f32 %v638, %v677
      %v679 = vpop.f32.mrf.mxu0
      %v680 = vadd.f32 %v642, %v679
      %681 = vdwg.mxu0
      %vm682 = vcmp.ge.f32.partialorder %v673, 0.0
      %vm683 = vcmp.ge.f32.partialorder %v675, 0.0
      %vm684 = vcmp.ge.f32.partialorder %v678, 0.0
      %vm685 = vcmp.ge.f32.partialorder %v680, 0.0
      %v686 = vmul.f32 %v673, 0.2
      %v687 = vmul.f32 %v675, 0.2
      %v688 = vmul.f32 %v678, 0.2
      %v689 = vmul.f32 %v680, 0.2
      %v690 = vsel %vm682, %v673, %v686
      %v691 = vsel %vm683, %v675, %v687
      %v692 = vsel %vm684, %v678, %v688
      %v693 = vsel %vm685, %v680, %v689
      %v694 = vadd.f32 %v619, %v690
      %v695 = vadd.f32 %v620, %v691
      %v696 = vadd.f32 %v621, %v692
      %v697 = vadd.f32 %v622, %v693
      %v698 = vpack.c.bf16 %v695, %v694
      %v699 = vpack.c.bf16 %v697, %v696
      %v700 = vld [vmem:[%s4] sm:$0xf]
      %v701 = vld [vmem:[%s4 + $0x4] sm:$0xf]
      %v702 = vld [vmem:[%s4 + $0x8] sm:$0xf]
      %v703 = vld [vmem:[%s4 + $0xc] sm:$0xf]
      %704 = vset.pattern.permute.xlu0 3
      %705 = vperm.xlu0 %704, %v343
      %v706 = vpop.permute.xlu0 %705
      %708 = vset.pattern.permute.xlu0 3
      %709 = vperm.xlu0 %708, %v344
      %v710 = vpop.permute.xlu0 %709
      %712 = vset.pattern.permute.xlu0 3
      %713 = vperm.xlu0 %712, %v345
      %v714 = vpop.permute.xlu0 %713
      %716 = vset.pattern.permute.xlu0 3
      %717 = vperm.xlu0 %716, %v346
      %v718 = vpop.permute.xlu0 %717
      %v724 = vunpack.c.l.b16 %v700
      %v725 = vunpack.c.l.b16 %v701
      %v726 = vunpack.c.l.b16 %v702
      %v727 = vunpack.c.l.b16 %v703
      %v728 = vpack.c.b16 %v725, %v724
      %v729 = vpack.c.b16 %v727, %v726
      %vm730 = vcmask 261120
      %v732 = vsel %vm730, %v728, 0
      %v735 = vsel %vm730, %v729, 0
      %737 = vmatpush.bf16.msra.mxu0 0
      %738 = vmatpush.bf16.msra.mxu0 0
      %739 = vmatpush.bf16.msra.mxu0 0
      %740 = vmatpush.bf16.msra.mxu0 0
      %741 = vmatpush.bf16.msra.mxu0 0
      %742 = vmatpush.bf16.msra.mxu0 0
      %743 = vmatpush.bf16.msra.mxu0 %v699
      %744 = vmatpush.bf16.msra.mxu0 %v698
      %745 = vmatmul.bf16.gmra.mxu0 %v732
      %v746 = vpop.f32.mrf.mxu0
      %v747 = vadd.f32 %v706, %v746
      %v748 = vpop.f32.mrf.mxu0
      %v749 = vadd.f32 %v710, %v748
      %750 = vmatmul.bf16.gmra.mxu0 %v735
      %v751 = vpop.f32.mrf.mxu0
      %v752 = vadd.f32 %v714, %v751
      %v753 = vpop.f32.mrf.mxu0
      %v754 = vadd.f32 %v718, %v753
      %755 = vdwg.mxu0
      %v756 = vld [vmem:[%s5] sm:$0xf]
      %v757 = vld [vmem:[%s5 + $0x4] sm:$0xf]
      %v758 = vld [vmem:[%s5 + $0x8] sm:$0xf]
      %v759 = vld [vmem:[%s5 + $0xc] sm:$0xf]
      %v760 = vpack.c.bf16 %v749, %v747
      %v761 = vpack.c.bf16 %v754, %v752
      %762 = vset.pattern.permute.xlu0 2
      %763 = vperm.xlu0 %762, %v343
      %v764 = vpop.permute.xlu0 %763
      %766 = vset.pattern.permute.xlu0 2
      %767 = vperm.xlu0 %766, %v344
      %v768 = vpop.permute.xlu0 %767
      %770 = vset.pattern.permute.xlu0 2
      %771 = vperm.xlu0 %770, %v345
      %v772 = vpop.permute.xlu0 %771
      %774 = vset.pattern.permute.xlu0 2
      %775 = vperm.xlu0 %774, %v346
      %v776 = vpop.permute.xlu0 %775
      %v782 = vunpack.c.l.b16 %v756
      %v783 = vunpack.c.l.b16 %v757
      %v784 = vunpack.c.l.b16 %v758
      %v785 = vunpack.c.l.b16 %v759
      %v786 = vpack.c.b16 %v783, %v782
      %v787 = vpack.c.b16 %v785, %v784
      %v789 = vsel %vm730, %v786, 0
      %v792 = vsel %vm730, %v787, 0
      %794 = vmatpush.bf16.msra.mxu0 0
      %795 = vmatpush.bf16.msra.mxu0 0
      %796 = vmatpush.bf16.msra.mxu0 0
      %797 = vmatpush.bf16.msra.mxu0 0
      %798 = vmatpush.bf16.msra.mxu0 0
      %799 = vmatpush.bf16.msra.mxu0 0
      %800 = vmatpush.bf16.msra.mxu0 %v761
      %801 = vmatpush.bf16.msra.mxu0 %v760
      %802 = vmatmul.bf16.gmra.mxu0 %v789
      %v803 = vpop.f32.mrf.mxu0
      %v804 = vadd.f32 %v764, %v803
      %v805 = vpop.f32.mrf.mxu0
      %v806 = vadd.f32 %v768, %v805
      %807 = vmatmul.bf16.gmra.mxu0 %v792
      %v808 = vpop.f32.mrf.mxu0
      %v809 = vadd.f32 %v772, %v808
      %v810 = vpop.f32.mrf.mxu0
      %v811 = vadd.f32 %v776, %v810
      %812 = vdwg.mxu0
      %v813 = vxor.u32 %v804, 2147483648
      %v814 = vxor.u32 %v806, 2147483648
      %v815 = vxor.u32 %v809, 2147483648
      %v816 = vxor.u32 %v811, 2147483648
      %v817 = vmul.f32 %v813, 1.442695
      %v818 = vpow.pop %v817
      %v819 = vmul.f32 %v814, 1.442695
      %v820 = vpow.pop %v819
      %v821 = vmul.f32 %v815, 1.442695
      %v822 = vpow.pop %v821
      %v823 = vmul.f32 %v816, 1.442695
      %v824 = vpow.pop %v823
      %v825 = vadd.f32 %v818, 1.0
      %v826 = vadd.f32 %v820, 1.0
      %v827 = vadd.f32 %v822, 1.0
      %v828 = vadd.f32 %v824, 1.0
      %v829 = vrcp.pop %v825
      %v830 = vmul.f32 %v825, %v829
      %v831 = vsub.f32 1.0, %v830
      %v832 = vmul.f32 %v829, %v831
      %v833 = vadd.f32 %v829, %v832
      %vm834 = vweird.f32 %v825
      %vm835 = vweird.f32 %v829
      %vm836 = vmor %vm834, %vm835
      %v837 = vsel %vm836, %v829, %v833
      %v838 = vand.u32 2147483647, %v825
      %vm839 = vcmp.eq.f32.partialorder %v838, 8.507059e+37
      %v840 = vand.u32 %v825, 2147483648
      %v841 = vor.u32 1.1754944e-38, %v840
      %v842 = vsel %vm839, %v841, %v837
      %v843 = vmul.f32 1.0, %v842
      %v844 = vrcp.pop %v826
      %v845 = vmul.f32 %v826, %v844
      %v846 = vsub.f32 1.0, %v845
      %v847 = vmul.f32 %v844, %v846
      %v848 = vadd.f32 %v844, %v847
      %vm849 = vweird.f32 %v826
      %vm850 = vweird.f32 %v844
      %vm851 = vmor %vm849, %vm850
      %v852 = vsel %vm851, %v844, %v848
      %v853 = vand.u32 2147483647, %v826
      %vm854 = vcmp.eq.f32.partialorder %v853, 8.507059e+37
      %v855 = vand.u32 %v826, 2147483648
      %v856 = vor.u32 1.1754944e-38, %v855
      %v857 = vsel %vm854, %v856, %v852
      %v858 = vmul.f32 1.0, %v857
      %v859 = vrcp.pop %v827
      %v860 = vmul.f32 %v827, %v859
      %v861 = vsub.f32 1.0, %v860
      %v862 = vmul.f32 %v859, %v861
      %v863 = vadd.f32 %v859, %v862
      %vm864 = vweird.f32 %v827
      %vm865 = vweird.f32 %v859
      %vm866 = vmor %vm864, %vm865
      %v867 = vsel %vm866, %v859, %v863
      %v868 = vand.u32 2147483647, %v827
      %vm869 = vcmp.eq.f32.partialorder %v868, 8.507059e+37
      %v870 = vand.u32 %v827, 2147483648
      %v871 = vor.u32 1.1754944e-38, %v870
      %v872 = vsel %vm869, %v871, %v867
      %v873 = vmul.f32 1.0, %v872
      %v874 = vrcp.pop %v828
      %v875 = vmul.f32 %v828, %v874
      %v876 = vsub.f32 1.0, %v875
      %v877 = vmul.f32 %v874, %v876
      %v878 = vadd.f32 %v874, %v877
      %vm879 = vweird.f32 %v828
      %vm880 = vweird.f32 %v874
      %vm881 = vmor %vm879, %vm880
      %v882 = vsel %vm881, %v874, %v878
      %v883 = vand.u32 2147483647, %v828
      %vm884 = vcmp.eq.f32.partialorder %v883, 8.507059e+37
      %v885 = vand.u32 %v828, 2147483648
      %v886 = vor.u32 1.1754944e-38, %v885
      %v887 = vsel %vm884, %v886, %v882
      %v888 = vmul.f32 1.0, %v887
      %v889 = vsub.f32 %v619, %v690
      %v890 = vsub.f32 %v620, %v691
      %v891 = vsub.f32 %v621, %v692
      %v892 = vsub.f32 %v622, %v693
      %v893 = vmul.f32 %v843, %v889
      %v894 = vmul.f32 %v858, %v890
      %v895 = vmul.f32 %v873, %v891
      %v896 = vmul.f32 %v888, %v892
      %v897 = vadd.f32 %v690, %v893
      %v898 = vadd.f32 %v691, %v894
      %v899 = vadd.f32 %v692, %v895
      %v900 = vadd.f32 %v693, %v896
      %v901 = vpack.c.bf16 %v897, %v897
      %v902 = vpack.c.bf16 %v898, %v898
      %v903 = vpack.c.bf16 %v899, %v899
      %v904 = vpack.c.bf16 %v900, %v900
      %905 = vst [vmem:[%s337] sm:$0xf] %v901
      %906 = vst [vmem:[%s337 + $0x4] sm:$0xf] %v902
      %907 = vst [vmem:[%s337 + $0x8] sm:$0xf] %v903
      %908 = vst [vmem:[%s337 + $0xc] sm:$0xf] %v904
      %p909 = scmp.lt.s32.totalorder %s22, 1
      %s910 = scalar_select %p909, %s22, 1
      %p911 = scmp.lt.s32.totalorder %s23, 0
      %s912 = scalar_select %p911, %s23, 0
      %s913 = smul.addr %s910, 4
      %s914 = sadd.s32 %s912, %s913
      %s915 = smul.addr %s914, 4
      %s916 = scalar_lea.vmem %s7, %s915
      // Predicated region
      $region49: #{lgfa_forward_pallas.1} parent=47 // pred_check
        %p917 = pneg %p211
      $region50: #{lgfa_forward_pallas.1} parent=47 // pred_check_branch
        %919 = sbr.rel (%p917) target = $region52
      $region51: #{lgfa_forward_pallas.1} parent=47 // pred_region
        _
      $region52: #{lgfa_forward_pallas.1} parent=47 // pred_fallthru
        _
    $region48: #{lgfa_forward_pallas.1} parent=5 // pred_fallthru
      _
    %p920 = scmp.le.s32.totalorder 2, %s13
    // Predicated region
    $region53: #{lgfa_forward_pallas.1} parent=5 // pred_check
      %p921 = pneg %p920
    $region54: #{lgfa_forward_pallas.1} parent=5 // pred_check_branch
      %923 = sbr.rel (%p921) target = $region56
    $region55: #{lgfa_forward_pallas.1} parent=5 // pred_region
      %s924 = ssub.s32 %s13, 2
      // Predicated region
      $region57: #{lgfa_forward_pallas.1} parent=55 // pred_check
        %p925 = pneg %p217
      $region58: #{lgfa_forward_pallas.1} parent=55 // pred_check_branch
        %927 = sbr.rel (%p925) target = $region60
      $region59: #{lgfa_forward_pallas.1} parent=55 // pred_region
        %p928 = scmp.lt.s32.totalorder %s24, 1
        %s929 = scalar_select %p928, %s24, 1
        %p930 = scmp.lt.s32.totalorder %s25, 0
        %s931 = scalar_select %p930, %s25, 0
        %s932 = smul.addr %s929, 4
        %s933 = sadd.s32 %s931, %s932
        %s934 = smul.addr %s933, 4
        %s935 = scalar_lea.vmem %s7, %s934
      $region60: #{lgfa_forward_pallas.1} parent=55 // pred_fallthru
        _
    $region56: #{lgfa_forward_pallas.1} parent=5 // pred_fallthru
      _
  $region6: #{lgfa_forward_pallas.1} parent=0 // loop_footer
    %s17 = sadd.s32 1, %s13
  $region7: #{lgfa_forward_pallas.1} parent=0 // loop_footer_branch
    %12 = sbr.rel target = $region3
  $region8: #{lgfa_forward_pallas.1} parent=0 // loop_exit
    _

</llo_original>
